<compile_context>
chip_gen: v7x
topology: tpu7x:2x2x1
jax: 0.10.0
libtpu: 0.0.40
codegen_flags: <defaults>
</compile_context>

<pallas_src>
import jax
import jax.numpy as jnp
from jax.experimental import pallas as pl
from jax.experimental.pallas import tpu as pltpu


def nsp_kernel(x_ref, w_ref, b_ref, o_ref, acc_ref):
    k = pl.program_id(1)

    @pl.when(k == 0)
    def _():
        acc_ref[...] = jnp.zeros_like(acc_ref)

    # (tb, tk) @ (tk, 2) on the MXU, f32 accumulation in VMEM scratch.
    acc_ref[...] += jnp.dot(x_ref[...], w_ref[...],
                            preferred_element_type=jnp.float32)

    @pl.when(k == pl.num_programs(1) - 1)
    def _():
        o_ref[...] = (acc_ref[...] + b_ref[...].astype(jnp.float32)).astype(o_ref.dtype)


def _round_up(x, m):
    return ((x + m - 1) // m) * m


def _round_down(x, m):
    return (x // m) * m


def _sublane_multiple(dtype):
    # f32 -> 8, bf16 -> 16, int8/fp8 -> 32 (sub-32-bit dtypes pack along sublanes).
    return max(8, 32 // jnp.dtype(dtype).itemsize)


def _pick_k_tile(D):
    """Split the contraction axis only for very large D (keeps X buffers bounded)."""
    if D <= 8192:
        return D
    for cand in (4096, 2048, 1024, 512, 256, 128):
        if D % cand == 0:
            return cand
    return D  # no clean 128-multiple divisor: stream full rows


def _pick_batch_tile(B, tk, dtype, tb_cap=2048):
    sub = _sublane_multiple(dtype)
    itemsize = jnp.dtype(dtype).itemsize
    padded_b = _round_up(B, sub)

    # VMEM budget for the double-buffered X stream (generation-aware, v7x-safe).
    try:
        vmem_bytes = int(pltpu.get_tpu_info().vmem_capacity_bytes)
    except Exception:
        vmem_bytes = 64 << 20  # conservative: v7x physical VMEM per TensorCore
    x_budget = min(24 << 20, int(0.4 * vmem_bytes))

    tb_by_vmem = _round_down(x_budget // max(1, 2 * tk * itemsize), sub)
    tb = max(sub, min(tb_cap, tb_by_vmem, padded_b))

    # v7x megacore: if the whole batch fits in one tile, split it into two
    # balanced tiles so both TensorCores participate on the "parallel" axis.
    if padded_b >= 2 * sub and pl.cdiv(B, tb) < 2:
        tb = _round_up(pl.cdiv(padded_b, 2), sub)
    return tb


def next_sentence_pred(x, w_t, b, *, tb=None, tk=None):
    """x: (B, D), w_t: (D, 2) (transposed Linear weight), b: (1, 2)."""
    B, D = x.shape
    assert w_t.shape == (D, 2)
    assert b.shape == (1, 2)

    if tk is None:
        tk = _pick_k_tile(D)
    if tb is None:
        tb = _pick_batch_tile(B, tk, x.dtype)

    grid = (pl.cdiv(B, tb), pl.cdiv(D, tk))

    out_dtype = x.dtype
    x_item = jnp.dtype(x.dtype).itemsize
    w_item = jnp.dtype(w_t.dtype).itemsize
    o_item = jnp.dtype(out_dtype).itemsize

    cost = pl.CostEstimate(
        flops=4 * B * D,  # 2 * B * D * 2 MACs
        bytes_accessed=B * D * x_item + 2 * D * w_item + 2 * w_item + 2 * B * o_item,
        transcendentals=0,
    )

    # Explicit scoped-VMEM request: X double-buffer + weight/bias/output + acc + slack.
    vmem_needed = (2 * tb * tk * x_item        # X double buffer
                   + 2 * tk * 2 * w_item       # weight
                   + 2 * 1 * 2 * w_item        # bias
                   + 2 * tb * 2 * o_item       # output double buffer
                   + tb * 2 * 4)               # f32 accumulator scratch
    vmem_limit = int(min(max(vmem_needed + (8 << 20), 32 << 20), 48 << 20))

    return pl.pallas_call(
        nsp_kernel,
        out_shape=jax.ShapeDtypeStruct((B, 2), out_dtype),
        grid=grid,
        in_specs=[
            # X streams through VMEM one (tb, tk) tile per step.
            pl.BlockSpec((tb, tk), lambda i, k: (i, k)),
            # Weight / bias: batch-invariant index_maps -> resident across batch tiles.
            pl.BlockSpec((tk, 2), lambda i, k: (k, 0)),
            pl.BlockSpec((1, 2), lambda i, k: (0, 0)),
        ],
        out_specs=pl.BlockSpec((tb, 2), lambda i, k: (i, 0)),
        scratch_shapes=[pltpu.VMEM((tb, 2), jnp.float32)],
        compiler_params=pltpu.CompilerParams(
            dimension_semantics=("parallel", "arbitrary"),
            vmem_limit_bytes=vmem_limit,
        ),
        cost_estimate=cost,
    )(x, w_t, b)


def _reference(x, w, b):
    return x.astype(jnp.float32) @ w.T.astype(jnp.float32) + b.astype(jnp.float32)


if __name__ == "__main__":
    key = jax.random.PRNGKey(0)
    k_x, k_w, k_b, k_x2 = jax.random.split(key, 4)

    batch = 8
    num_inputs = 32  # hidden size fed to the NSP head

    # Deterministic synthetic parameters (shapes match nn.Linear(num_inputs, 2)).
    bound = 1.0 / jnp.sqrt(jnp.float32(num_inputs))
    w = jax.random.uniform(k_w, (2, num_inputs), jnp.float32, -bound, bound)  # PyTorch layout
    b = jax.random.uniform(k_b, (2,), jnp.float32, -bound, bound)

    w_t = w.T                    # (num_inputs, 2)
    b2 = b.reshape(1, 2)         # (1, 2)

    # --- Main check: small f32 batch (single tile). ---
    x = jax.random.normal(k_x, (batch, num_inputs), jnp.float32)
    out = jax.block_until_ready(next_sentence_pred(x, w_t, b2))
    ref = _reference(x, w, b)
    assert out.shape == (batch, 2)
    assert jnp.allclose(out, ref, atol=1e-5, rtol=1e-5)

    # --- Secondary check: batch not a multiple of the tile -> multi-tile grid
    #     with a padded last block (padded rows are never written back). ---
    x2 = jax.random.normal(k_x2, (20, num_inputs), jnp.float32)
    out2 = jax.block_until_ready(next_sentence_pred(x2, w_t, b2))
    ref2 = _reference(x2, w, b)
    assert out2.shape == (20, 2)
    assert jnp.allclose(out2, ref2, atol=1e-5, rtol=1e-5)

    # --- Secondary check: bf16 path (16-sublane rounding, f32 accumulation). ---
    x3 = x2.astype(jnp.bfloat16)
    out3 = jax.block_until_ready(
        next_sentence_pred(x3, w_t.astype(jnp.bfloat16), b2.astype(jnp.bfloat16)))
    ref3 = _reference(x3, w.astype(jnp.bfloat16), b.astype(jnp.bfloat16))
    assert out3.shape == (20, 2)
    assert jnp.allclose(out3.astype(jnp.float32), ref3, atol=1e-1, rtol=5e-2)

    print("KERNEL_OK")
</pallas_src>

<mosaic_0001>
module attributes {stable_mosaic.version = 11 : i64} {
  func.func @nsp_kernel(%arg0: i32, %arg1: i32, %arg2: memref<8x32xf32, #tpu.memory_space<vmem>>, %arg3: memref<32x2xf32, #tpu.memory_space<vmem>>, %arg4: memref<1x2xf32, #tpu.memory_space<vmem>>, %arg5: memref<8x2xf32, #tpu.memory_space<vmem>>, %arg6: memref<8x2xf32, #tpu.memory_space<vmem>>) attributes {dimension_semantics = [#tpu.dimension_semantics<parallel>, #tpu.dimension_semantics<arbitrary>], iteration_bounds = array<i64: 1, 1>, scalar_prefetch = 0 : i64, scratch_operands = 1 : i64, tpu.core_type = #tpu.core_type<tc>, window_params = [{transform_indices = @transform_0, window_bounds = array<i64: 8, 32>}, {transform_indices = @transform_1, window_bounds = array<i64: 32, 2>}, {pipeline_mode = #tpu.pipeline_mode<synchronous>, transform_indices = @transform_2, window_bounds = array<i64: 1, 2>}, {transform_indices = @transform_3, window_bounds = array<i64: 8, 2>}]} {
    %c0_i32 = arith.constant 0 : i32
    %0 = arith.cmpi eq, %arg1, %c0_i32 : i32
    %1 = arith.extui %0 : i1 to i32
    %c0_i32_0 = arith.constant 0 : i32
    %2 = arith.cmpi ne, %1, %c0_i32_0 : i32
    scf.if %2 {
      %cst_10 = arith.constant 0.000000e+00 : f32
      %12 = vector.broadcast %cst_10 : f32 to vector<8x2xf32>
      %c0_11 = arith.constant 0 : index
      %c0_12 = arith.constant 0 : index
      %13 = vector.load %arg6[%c0_11, %c0_12] : memref<8x2xf32, #tpu.memory_space<vmem>>, vector<8x2xf32>
      tpu.vector_store %arg6[%c0_11, %c0_12], %12 {strides = array<i32>} : memref<8x2xf32, #tpu.memory_space<vmem>>, vector<8x2xf32>,
    } else {
    }
    %c0 = arith.constant 0 : index
    %c0_1 = arith.constant 0 : index
    %3 = vector.load %arg6[%c0, %c0_1] : memref<8x2xf32, #tpu.memory_space<vmem>>, vector<8x2xf32>
    %c0_2 = arith.constant 0 : index
    %c0_3 = arith.constant 0 : index
    %4 = vector.load %arg2[%c0_2, %c0_3] : memref<8x32xf32, #tpu.memory_space<vmem>>, vector<8x32xf32>
    %c0_4 = arith.constant 0 : index
    %c0_5 = arith.constant 0 : index
    %5 = vector.load %arg3[%c0_4, %c0_5] : memref<32x2xf32, #tpu.memory_space<vmem>>, vector<32x2xf32>
    %cst = arith.constant dense<0.000000e+00> : vector<8x2xf32>
    %6 = tpu.matmul %4, %5, %cst {dimension_numbers = #tpu.dot_dimension_numbers<[1], [0], [0], [1], [0, 0, 1, 1], [], []>} : vector<8x32xf32>, vector<32x2xf32>, vector<8x2xf32> -> vector<8x2xf32>
    %7 = arith.addf %3, %6 : vector<8x2xf32>
    %c0_6 = arith.constant 0 : index
    %c0_7 = arith.constant 0 : index
    %8 = vector.load %arg6[%c0_6, %c0_7] : memref<8x2xf32, #tpu.memory_space<vmem>>, vector<8x2xf32>
    tpu.vector_store %arg6[%c0_6, %c0_7], %7 {strides = array<i32>} : memref<8x2xf32, #tpu.memory_space<vmem>>, vector<8x2xf32>,
    %c0_i32_8 = arith.constant 0 : i32
    %9 = arith.cmpi eq, %arg1, %c0_i32_8 : i32
    %10 = arith.extui %9 : i1 to i32
    %c0_i32_9 = arith.constant 0 : i32
    %11 = arith.cmpi ne, %10, %c0_i32_9 : i32
    scf.if %11 {
      %c0_10 = arith.constant 0 : index
      %c0_11 = arith.constant 0 : index
      %12 = vector.load %arg6[%c0_10, %c0_11] : memref<8x2xf32, #tpu.memory_space<vmem>>, vector<8x2xf32>
      %c0_12 = arith.constant 0 : index
      %c0_13 = arith.constant 0 : index
      %13 = vector.load %arg4[%c0_12, %c0_13] : memref<1x2xf32, #tpu.memory_space<vmem>>, vector<1x2xf32>
      %14 = vector.broadcast %13 : vector<1x2xf32> to vector<8x2xf32>
      %15 = arith.addf %12, %14 : vector<8x2xf32>
      %c0_14 = arith.constant 0 : index
      %c0_15 = arith.constant 0 : index
      %16 = vector.load %arg5[%c0_14, %c0_15] : memref<8x2xf32, #tpu.memory_space<vmem>>, vector<8x2xf32>
      tpu.vector_store %arg5[%c0_14, %c0_15], %15 {strides = array<i32>} : memref<8x2xf32, #tpu.memory_space<vmem>>, vector<8x2xf32>,
    } else {
    }
    return
  }
  func.func @transform_0(%arg0: i32, %arg1: i32) -> (i32, i32) {
    %c0_i32 = arith.constant 0 : i32
    return %arg0, %arg1 : i32, i32
  }
  func.func @transform_1(%arg0: i32, %arg1: i32) -> (i32, i32) {
    %c0_i32 = arith.constant 0 : i32
    %c0_i32_0 = arith.constant 0 : i32
    return %arg1, %c0_i32 : i32, i32
  }
  func.func @transform_2(%arg0: i32, %arg1: i32) -> (i32, i32) {
    %c0_i32 = arith.constant 0 : i32
    %c0_i32_0 = arith.constant 0 : i32
    %c0_i32_1 = arith.constant 0 : i32
    return %c0_i32, %c0_i32_0 : i32, i32
  }
  func.func @transform_3(%arg0: i32, %arg1: i32) -> (i32, i32) {
    %c0_i32 = arith.constant 0 : i32
    %c0_i32_0 = arith.constant 0 : i32
    return %arg0, %c0_i32 : i32, i32
  }
}

</mosaic_0001>

<llo_original>
// kernel: tpu_custom_call.1
$region0: #{tpu_custom_call.1}
  #allocation0 [shape = 'u32[]', space=smem, size = 0x4, offset = 0x4, fixed_abs, tag = 'smem constant byte address 0x4 - core index']
  #allocation1 [shape = 'u32[144,128]{1,0:T(1,128)}', space=vmem, size = 0x12000, scoped, tag = 'internal scratch']
  #allocation2 [shape = 'f32[8,2]{1,0:T(8,128)}', space=vmem, size = 0x1000, scoped, tag = 'scratch operand']
  %s0 = inlined_call_operand.vmem [shape: f32[8,32], index: 0, kind: input, shape index: {}]
  %s1 = inlined_call_operand.vmem [shape: f32[32,2], index: 1, kind: input, shape index: {}]
  %s2 = inlined_call_operand.vmem [shape: f32[1,2], index: 2, kind: input, shape index: {}]
  %s3 = inlined_call_operand.vmem [shape: f32[8,2], index: 3, kind: output, shape index: {}]
  %s4 = sld [smem:[#allocation0]]
  $region30: #{tpu_custom_call.1} parent=0
    _
  %s6 = ssub.s32 1, %s4
  %s7 = scalar_select 0, %s6, %s4
  // Predicated region
  $region2: #{tpu_custom_call.1} parent=0 // pred_check
    _
  $region3: #{tpu_custom_call.1} parent=0 // pred_check_branch
    %9 = sbr.rel (0) target = $region5
  $region4: #{tpu_custom_call.1} parent=0 // pred_region
    _
  $region5: #{tpu_custom_call.1} parent=0 // pred_fallthru
    _
  // Predicated region
  $region6: #{tpu_custom_call.1} parent=0 // pred_check
    _
  $region7: #{tpu_custom_call.1} parent=0 // pred_check_branch
    %11 = sbr.rel (0) target = $region9
  $region8: #{tpu_custom_call.1} parent=0 // pred_region
    _
  $region9: #{tpu_custom_call.1} parent=0 // pred_fallthru
    _
  // Predicated region
  $region10: #{tpu_custom_call.1} parent=0 // pred_check
    _
  $region11: #{tpu_custom_call.1} parent=0 // pred_check_branch
    %13 = sbr.rel (0) target = $region13
  $region12: #{tpu_custom_call.1} parent=0 // pred_region
    _
  $region13: #{tpu_custom_call.1} parent=0 // pred_fallthru
    _
  %p14 = scmp.eq.s32.totalorder 0, 0
  // Predicated region
  $region14: #{tpu_custom_call.1} parent=0 // pred_check
    %p15 = pneg %p14
  $region15: #{tpu_custom_call.1} parent=0 // pred_check_branch
    %17 = sbr.rel (%p15) target = $region17
  $region16: #{tpu_custom_call.1} parent=0 // pred_region
    %vm18 = vcmask 15360
    %19 = vst.msk [vmem:[#allocation2] sm:$0xff] %vm18, 0.0
  $region17: #{tpu_custom_call.1} parent=0 // pred_fallthru
    _
  %v20 = vld [vmem:[#allocation2] sm:$0xff]
  %v21 = vld [vmem:[%s0] sm:$0xff]
  %v22 = vld [vmem:[%s1] sm:$0xff]
  %v23 = vld [vmem:[%s1 + $0x8] sm:$0xff]
  %v24 = vld [vmem:[%s1 + $0x10] sm:$0xff]
  %v25 = vld [vmem:[%s1 + $0x18] sm:$0xff]
  %vm26 = vcmask 261120
  %v28 = vsel %vm26, %v21, 0
  %30 = vmatprep.subr.mxu0 0.0
  %31 = vmatpush1.msra.mxu0 %v22
  %32 = vmatprep.subr.mxu0 0.0
  %33 = vmatpush1.msra.mxu0 %v23
  %34 = vmatprep.subr.mxu0 0.0
  %35 = vmatpush1.msra.mxu0 %v24
  %36 = vmatprep.subr.mxu0 0.0
  %37 = vmatpush1.msra.mxu0 %v25
  %38 = vmatprep.subr.mxu0 0.0
  %39 = vmatpush1.msra.mxu0 0.0
  %40 = vmatprep.subr.mxu0 0.0
  %41 = vmatpush1.msra.mxu0 0.0
  %42 = vmatprep.subr.mxu0 0.0
  %43 = vmatpush1.msra.mxu0 0.0
  %44 = vmatprep.subr.mxu0 0.0
  %45 = vmatpush1.msra.mxu0 0.0
  %46 = vmatprep.subr.mxu0 0.0
  %47 = vmatpush1.msra.mxu0 0.0
  %48 = vmatprep.subr.mxu0 0.0
  %49 = vmatpush1.msra.mxu0 0.0
  %50 = vmatprep.subr.mxu0 0.0
  %51 = vmatpush1.msra.mxu0 0.0
  %52 = vmatprep.subr.mxu0 0.0
  %53 = vmatpush1.msra.mxu0 0.0
  %54 = vmatprep.subr.mxu0 0.0
  %55 = vmatpush1.msra.mxu0 0.0
  %56 = vmatprep.subr.mxu0 0.0
  %57 = vmatpush1.msra.mxu0 0.0
  %58 = vmatprep.subr.mxu0 0.0
  %59 = vmatpush1.msra.mxu0 0.0
  %60 = vmatprep.subr.mxu0 0.0
  %61 = vmatpush1.msra.mxu0 0.0
  %62 = vmatprep.subr.mxu0 0.0
  %63 = vmatpush1.msra.mxu0 0.0
  %64 = vmatprep.subr.mxu0 0.0
  %65 = vmatpush1.msra.mxu0 0.0
  %66 = vmatprep.subr.mxu0 0.0
  %67 = vmatpush1.msra.mxu0 0.0
  %68 = vmatprep.subr.mxu0 0.0
  %69 = vmatpush1.msra.mxu0 0.0
  %70 = vmatprep.subr.mxu0 0.0
  %71 = vmatpush1.msra.mxu0 0.0
  %72 = vmatprep.subr.mxu0 0.0
  %73 = vmatpush1.msra.mxu0 0.0
  %74 = vmatprep.subr.mxu0 0.0
  %75 = vmatpush1.msra.mxu0 0.0
  %76 = vmatprep.subr.mxu0 0.0
  %77 = vmatpush1.msra.mxu0 0.0
  %78 = vmatprep.subr.mxu0 0.0
  %79 = vmatpush1.msra.mxu0 0.0
  %80 = vmatprep.subr.mxu0 0.0
  %81 = vmatpush1.msra.mxu0 0.0
  %82 = vmatprep.subr.mxu0 0.0
  %83 = vmatpush1.msra.mxu0 0.0
  %84 = vmatprep.subr.mxu0 0.0
  %85 = vmatpush1.msra.mxu0 0.0
  %86 = vmatprep.subr.mxu0 0.0
  %87 = vmatpush1.msra.mxu0 0.0
  %88 = vmatprep.subr.mxu0 0.0
  %89 = vmatpush1.msra.mxu0 0.0
  %90 = vmatprep.subr.mxu0 0.0
  %91 = vmatpush1.msra.mxu0 0.0
  %92 = vmatprep.subr.mxu0 0.0
  %93 = vmatpush1.msra.mxu0 0.0
  %94 = vmatprep.mubr.f32.mxu0 0.0
  %95 = vmatmul.mubr.f32.gmra.mrb[0].mxu0 %v28
  %v96 = vpop.f32.mrb[0].mxu0
  %v97 = vadd.f32 0.0, %v96
  %v98 = vpop.f32.mrb[0].mxu0
  %99 = vdwg.mxu0
  %v100 = vadd.f32 %v20, %v97
  %vm101 = vcmask 15360
  %102 = vst.msk [vmem:[#allocation2] sm:$0xff] %vm101, %v100
  // Predicated region
  $region18: #{tpu_custom_call.1} parent=0 // pred_check
    %p103 = pneg %p14
  $region19: #{tpu_custom_call.1} parent=0 // pred_check_branch
    %105 = sbr.rel (%p103) target = $region21
  $region20: #{tpu_custom_call.1} parent=0 // pred_region
    %v106 = vld [vmem:[#allocation2] sm:$0xff]
    %v107 = vld [vmem:[%s2] sm:$0x1]
    %v109 = vlaneseq
    %v110 = vshrl.u32 %v109, 7
    %v111 = vsub.s32 0, %v110
    %v112 = vrot.slane %v107, %v111
    %v114 = vadd.f32 %v106, %v112
    %115 = vst.msk [vmem:[%s3] sm:$0xff] %vm101, %v114
  $region21: #{tpu_custom_call.1} parent=0 // pred_fallthru
    _
  // Predicated region
  $region22: #{tpu_custom_call.1} parent=0 // pred_check
    _
  $region23: #{tpu_custom_call.1} parent=0 // pred_check_branch
    %117 = sbr.rel (0) target = $region25
  $region24: #{tpu_custom_call.1} parent=0 // pred_region
    _
  $region25: #{tpu_custom_call.1} parent=0 // pred_fallthru
    _
  // Predicated region
  $region26: #{tpu_custom_call.1} parent=0 // pred_check
    _
  $region27: #{tpu_custom_call.1} parent=0 // pred_check_branch
    %119 = sbr.rel (0) target = $region29
  $region28: #{tpu_custom_call.1} parent=0 // pred_region
    _
  $region29: #{tpu_custom_call.1} parent=0 // pred_fallthru
    _

</llo_original>
